<compile_context>
chip_gen: v7x
topology: tpu7x:2x2x1
jax: 0.10.0
libtpu: 0.0.40
codegen_flags: <defaults>
</compile_context>

<pallas_src>
import jax
import jax.numpy as jnp
from jax import lax
from jax.experimental import pallas as pl
from jax.experimental.pallas import tpu as pltpu


def message_kernel(idx_ref, xwl_ref, xwr_ref, out_ref):
    """One (edge-split c, feature-tile j, edge-tile e) grid step.

    idx_ref : (2, TE)  int32   row 0 = src, row 1 = dst (padding sentinel = 2V)
    xwl_ref : (2V, TN) bf16    [x @ W11 ; x @ W21]  (column tile j)  -> y[:, :H]
    xwr_ref : (2V, TN) bf16    [x @ W12 ; x @ W22]  (column tile j)  -> y[:, H:]
    out_ref : (V, TN)  f32     resident accumulator for output block (c, j)
    """
    @pl.when(pl.program_id(2) == 0)
    def _init():
        out_ref[...] = jnp.zeros_like(out_ref)

    V = out_ref.shape[0]
    V2 = xwl_ref.shape[0]          # 2 * V
    TE = idx_ref.shape[1]

    src = idx_ref[0:1, :]          # (1, TE)
    dst = idx_ref[1:2, :]          # (1, TE)

    # ---- fused gather + Linear -----------------------------------------------------
    # One-hot over the stacked 2V rows: column e has ones at rows src[e] and V + dst[e],
    # so a single K=2V matmul per half reconstructs
    #   y_left[e]  = x[src[e]] @ W11 + x[dst[e]] @ W21      (= y[e, :H])
    #   y_right[e] = x[src[e]] @ W12 + x[dst[e]] @ W22      (= y[e, H:])
    # Padded edges (sentinel 2V) match no row -> all-zero columns.
    vid2 = lax.broadcasted_iota(jnp.int32, (V2, TE), 0)
    e2 = ((vid2 == src) | (vid2 == dst + V)).astype(jnp.bfloat16)          # (2V, TE)

    dn = (((0,), (0,)), ((), ()))   # contract over axis 0 of both operands (no transpose)
    y_left = lax.dot_general(e2, xwl_ref[...], dn,
                             preferred_element_type=jnp.float32)           # (TE, TN) f32
    y_right = lax.dot_general(e2, xwr_ref[...], dn,
                              preferred_element_type=jnp.float32)          # (TE, TN) f32

    # ---- scatter-add on the MXU ----------------------------------------------------
    # out[v] += sum_{src[e]==v} y_left[e] + sum_{dst[e]==v} y_right[e]
    # as (V, TE) @ (TE, TN) matmuls; TE=256 already fills the 256-deep v6e/v7x MXU.
    # y is rounded to bf16 (one extra rounding vs torch's f32; accumulation stays f32).
    vid1 = lax.broadcasted_iota(jnp.int32, (V, TE), 0)
    eh_src = (vid1 == src).astype(jnp.bfloat16)                            # (V, TE)
    eh_dst = (vid1 == dst).astype(jnp.bfloat16)                            # (V, TE)
    out_ref[...] += (
        jnp.dot(eh_src, y_left.astype(jnp.bfloat16), preferred_element_type=jnp.float32)
        + jnp.dot(eh_dst, y_right.astype(jnp.bfloat16), preferred_element_type=jnp.float32))


def message_network_forward(x, edge_idx, weight, *, edge_tile=256, edge_splits=2):
    """x: (V, H) f32 ; edge_idx: (2, E) int ; weight: torch-style Linear weight (out=2H, in=2H)."""
    V, H = x.shape
    E = int(edge_idx.shape[1])

    TN = 128                                   # output-feature tile (lane-dense)
    TE = int(edge_tile)                        # edge tile (multiple of 128)
    Hp = ((H + TN - 1) // TN) * TN             # features padded to full lanes
    nj = Hp // TN

    # Edge-split axis: a second "parallel" grid dimension for v7x even when nj == 1,
    # without creating pure-padding splits for small edge counts.
    nc = max(1, min(int(edge_splits), pl.cdiv(E, TE)))
    ne = max(1, pl.cdiv(E, nc * TE))           # edge tiles per split
    E_pad = nc * ne * TE

    # Padded edge indices; sentinel 2V matches neither the V-row nor the 2V-row one-hots.
    sent = jnp.int32(2 * V)
    src_p = jnp.full((E_pad,), sent, jnp.int32).at[:E].set(edge_idx[0].astype(jnp.int32))
    dst_p = jnp.full((E_pad,), sent, jnp.int32).at[:E].set(edge_idx[1].astype(jnp.int32))
    idx = jnp.stack([src_p, dst_p], axis=0)    # (2, E_pad)

    # Linear applied BEFORE the gather: four (V, H) products of x with the W^T blocks,
    # stacked so a single one-hot gather over 2V rows reconstructs y.
    wt = weight.T.astype(jnp.float32)          # (in=2H, out=2H):  y = xc @ wt
    x32 = x.astype(jnp.float32)
    hi = jax.lax.Precision.HIGHEST

    def pad_feat(a):                           # (V, H) f32 -> (V, Hp) f32, zero-padded lanes
        return jnp.zeros((V, Hp), jnp.float32).at[:, :H].set(a)

    xw_l = jnp.concatenate([pad_feat(jnp.dot(x32, wt[:H, :H], precision=hi)),
                            pad_feat(jnp.dot(x32, wt[H:, :H], precision=hi))],
                           axis=0).astype(jnp.bfloat16)            # (2V, Hp): [xW11 ; xW21]
    xw_r = jnp.concatenate([pad_feat(jnp.dot(x32, wt[:H, H:], precision=hi)),
                            pad_feat(jnp.dot(x32, wt[H:, H:], precision=hi))],
                           axis=0).astype(jnp.bfloat16)            # (2V, Hp): [xW12 ; xW22]

    grid_spec = pltpu.PrefetchScalarGridSpec(
        num_scalar_prefetch=0,
        grid=(nc, nj, ne),                     # (edge splits, feature tiles, edge reduction)
        in_specs=[
            pl.BlockSpec((2, TE), lambda c, j, e: (0, c * ne + e)),    # src/dst tile
            pl.BlockSpec((2 * V, TN), lambda c, j, e: (0, j)),         # [xW11 ; xW21] col tile
            pl.BlockSpec((2 * V, TN), lambda c, j, e: (0, j)),         # [xW12 ; xW22] col tile
        ],
        out_specs=pl.BlockSpec((None, V, TN), lambda c, j, e: (c, 0, j)),  # acc across e
    )

    steps = nc * nj * ne
    flops = steps * (2 * 2 * (2 * V) * TE * TN      # fused gather+linear (2 matmuls, K=2V)
                     + 2 * 2 * V * TE * TN)         # one-hot scatter     (2 matmuls, K=TE)
    bytes_accessed = (2 * E_pad * 4 + 2 * (2 * V) * Hp * 2 + nc * V * Hp * 4)

    out_p = pl.pallas_call(
        message_kernel,
        out_shape=jax.ShapeDtypeStruct((nc, V, Hp), jnp.float32),
        grid_spec=grid_spec,
        compiler_params=pltpu.CompilerParams(
            dimension_semantics=("parallel", "parallel", "arbitrary"),
            vmem_limit_bytes=32 * 1024 * 1024),
        cost_estimate=pl.CostEstimate(flops=flops, transcendentals=0,
                                      bytes_accessed=bytes_accessed),
    )(idx, xw_l, xw_r)

    # Sum the (tiny) per-split partial accumulators and drop feature padding.
    return out_p.sum(axis=0)[:, :H]


def message_network_reference(x, edge_idx, weight):
    src, dst = edge_idx[0], edge_idx[1]
    xc = jnp.concatenate([x[src], x[dst]], axis=1)
    y = jnp.dot(xc, weight.T, precision=jax.lax.Precision.HIGHEST)
    V, H = x.shape
    return (jax.ops.segment_sum(y[:, :H], src, num_segments=V)
            + jax.ops.segment_sum(y[:, H:], dst, num_segments=V))


if __name__ == "__main__":
    key = jax.random.PRNGKey(0)
    k1, k2, k3, k4 = jax.random.split(key, 4)

    num_vars = 16
    hidden_dim = 32
    num_edges = 600   # exercises both the edge-split "parallel" axis and multi-tile accumulation

    # Deterministic synthetic parameters / inputs (Linear(2H, 2H, bias=False) weight).
    x = jax.random.normal(k1, (num_vars, hidden_dim), dtype=jnp.float32)
    weight = (jax.random.normal(k2, (2 * hidden_dim, 2 * hidden_dim), dtype=jnp.float32)
              * (1.0 / jnp.sqrt(2.0 * hidden_dim)))
    src = jax.random.randint(k3, (num_edges,), 0, num_vars, dtype=jnp.int32)
    dst = jax.random.randint(k4, (num_edges,), 0, num_vars, dtype=jnp.int32)
    edge_idx = jnp.stack([src, dst], axis=0)   # (2, E)

    out = message_network_forward(x, edge_idx, weight)
    out = jax.block_until_ready(out)

    ref = message_network_reference(x, edge_idx, weight)
    assert out.shape == (num_vars, hidden_dim)

    # bf16 MXU operands with f32 accumulation over ~2E/V terms per vertex: compare with a
    # scale-relative bound instead of per-element atol.
    err = float(jnp.max(jnp.abs(out - ref)))
    scale = float(jnp.max(jnp.abs(ref)))
    assert err <= 2e-2 * scale + 1e-2, f"mismatch vs reference: err={err:.4f}, scale={scale:.4f}"

    print("KERNEL_OK")
</pallas_src>

<mosaic_0001>
module attributes {stable_mosaic.version = 11 : i64} {
  func.func @message_kernel(%arg0: i32, %arg1: i32, %arg2: i32, %arg3: memref<2x256xi32, #tpu.memory_space<vmem>>, %arg4: memref<32x128xbf16, #tpu.memory_space<vmem>>, %arg5: memref<32x128xbf16, #tpu.memory_space<vmem>>, %arg6: memref<1x16x128xf32, #tpu.memory_space<vmem>>) attributes {dimension_semantics = [#tpu.dimension_semantics<parallel>, #tpu.dimension_semantics<parallel>, #tpu.dimension_semantics<arbitrary>], iteration_bounds = array<i64: 2, 1, 2>, scalar_prefetch = 0 : i64, scratch_operands = 0 : i64, tpu.core_type = #tpu.core_type<tc>, window_params = [{transform_indices = @transform_0, window_bounds = array<i64: 2, 256>}, {transform_indices = @transform_1, window_bounds = array<i64: 32, 128>}, {transform_indices = @transform_2, window_bounds = array<i64: 32, 128>}, {transform_indices = @transform_3, window_bounds = array<i64: 1, 16, 128>}]} {
    %c0_i32 = arith.constant 0 : i32
    %0 = arith.cmpi eq, %arg2, %c0_i32 : i32
    %1 = arith.extui %0 : i1 to i32
    %c0_i32_0 = arith.constant 0 : i32
    %2 = arith.cmpi ne, %1, %c0_i32_0 : i32
    scf.if %2 {
      %cst_16 = arith.constant 0.000000e+00 : f32
      %42 = vector.broadcast %cst_16 : f32 to vector<16x128xf32>
      %c0_17 = arith.constant 0 : index
      %c0_18 = arith.constant 0 : index
      %c0_19 = arith.constant 0 : index
      %43 = vector.load %arg6[%c0_17, %c0_18, %c0_19] : memref<1x16x128xf32, #tpu.memory_space<vmem>>, vector<1x16x128xf32>
      %44 = vector.shape_cast %43 : vector<1x16x128xf32> to vector<16x128xf32>
      %45 = vector.shape_cast %42 : vector<16x128xf32> to vector<1x16x128xf32>
      tpu.vector_store %arg6[%c0_17, %c0_18, %c0_19], %45 {strides = array<i32>} : memref<1x16x128xf32, #tpu.memory_space<vmem>>, vector<1x16x128xf32>,
    } else {
    }
    %c0 = arith.constant 0 : index
    %c0_1 = arith.constant 0 : index
    %3 = vector.load %arg3[%c0, %c0_1] : memref<2x256xi32, #tpu.memory_space<vmem>>, vector<1x256xi32>
    %c1 = arith.constant 1 : index
    %c0_2 = arith.constant 0 : index
    %4 = vector.load %arg3[%c1, %c0_2] : memref<2x256xi32, #tpu.memory_space<vmem>>, vector<1x256xi32>
    %5 = tpu.iota {dimensions = array<i32: 0>} : vector<32x256xi32>
    %6 = vector.broadcast %3 : vector<1x256xi32> to vector<32x256xi32>
    %7 = arith.cmpi eq, %5, %6 : vector<32x256xi32>
    %c16_i32 = arith.constant 16 : i32
    %8 = vector.broadcast %c16_i32 : i32 to vector<1x256xi32>
    %9 = arith.addi %4, %8 : vector<1x256xi32>
    %10 = vector.broadcast %9 : vector<1x256xi32> to vector<32x256xi32>
    %11 = arith.cmpi eq, %5, %10 : vector<32x256xi32>
    %12 = arith.ori %7, %11 : vector<32x256xi1>
    %13 = arith.extui %12 : vector<32x256xi1> to vector<32x256xi32>
    %14 = arith.sitofp %13 : vector<32x256xi32> to vector<32x256xf32>
    %15 = arith.truncf %14 : vector<32x256xf32> to vector<32x256xbf16>
    %c0_3 = arith.constant 0 : index
    %c0_4 = arith.constant 0 : index
    %16 = vector.load %arg4[%c0_3, %c0_4] : memref<32x128xbf16, #tpu.memory_space<vmem>>, vector<32x128xbf16>
    %cst = arith.constant dense<0.000000e+00> : vector<256x128xf32>
    %17 = tpu.matmul %15, %16, %cst {dimension_numbers = #tpu.dot_dimension_numbers<[0], [0], [1], [1], [0, 1, 1, 1], [], []>} : vector<32x256xbf16>, vector<32x128xbf16>, vector<256x128xf32> -> vector<256x128xf32>
    %c0_5 = arith.constant 0 : index
    %c0_6 = arith.constant 0 : index
    %18 = vector.load %arg5[%c0_5, %c0_6] : memref<32x128xbf16, #tpu.memory_space<vmem>>, vector<32x128xbf16>
    %cst_7 = arith.constant dense<0.000000e+00> : vector<256x128xf32>
    %19 = tpu.matmul %15, %18, %cst_7 {dimension_numbers = #tpu.dot_dimension_numbers<[0], [0], [1], [1], [0, 1, 1, 1], [], []>} : vector<32x256xbf16>, vector<32x128xbf16>, vector<256x128xf32> -> vector<256x128xf32>
    %20 = tpu.iota {dimensions = array<i32: 0>} : vector<16x256xi32>
    %21 = vector.broadcast %3 : vector<1x256xi32> to vector<16x256xi32>
    %22 = arith.cmpi eq, %20, %21 : vector<16x256xi32>
    %23 = arith.extui %22 : vector<16x256xi1> to vector<16x256xi32>
    %24 = arith.sitofp %23 : vector<16x256xi32> to vector<16x256xf32>
    %25 = arith.truncf %24 : vector<16x256xf32> to vector<16x256xbf16>
    %26 = vector.broadcast %4 : vector<1x256xi32> to vector<16x256xi32>
    %27 = arith.cmpi eq, %20, %26 : vector<16x256xi32>
    %28 = arith.extui %27 : vector<16x256xi1> to vector<16x256xi32>
    %29 = arith.sitofp %28 : vector<16x256xi32> to vector<16x256xf32>
    %30 = arith.truncf %29 : vector<16x256xf32> to vector<16x256xbf16>
    %c0_8 = arith.constant 0 : index
    %c0_9 = arith.constant 0 : index
    %c0_10 = arith.constant 0 : index
    %31 = vector.load %arg6[%c0_8, %c0_9, %c0_10] : memref<1x16x128xf32, #tpu.memory_space<vmem>>, vector<1x16x128xf32>
    %32 = vector.shape_cast %31 : vector<1x16x128xf32> to vector<16x128xf32>
    %33 = arith.truncf %17 : vector<256x128xf32> to vector<256x128xbf16>
    %cst_11 = arith.constant dense<0.000000e+00> : vector<16x128xf32>
    %34 = tpu.matmul %25, %33, %cst_11 {dimension_numbers = #tpu.dot_dimension_numbers<[1], [0], [0], [1], [0, 0, 1, 1], [], []>} : vector<16x256xbf16>, vector<256x128xbf16>, vector<16x128xf32> -> vector<16x128xf32>
    %35 = arith.truncf %19 : vector<256x128xf32> to vector<256x128xbf16>
    %cst_12 = arith.constant dense<0.000000e+00> : vector<16x128xf32>
    %36 = tpu.matmul %30, %35, %cst_12 {dimension_numbers = #tpu.dot_dimension_numbers<[1], [0], [0], [1], [0, 0, 1, 1], [], []>} : vector<16x256xbf16>, vector<256x128xbf16>, vector<16x128xf32> -> vector<16x128xf32>
    %37 = arith.addf %34, %36 : vector<16x128xf32>
    %38 = arith.addf %32, %37 : vector<16x128xf32>
    %c0_13 = arith.constant 0 : index
    %c0_14 = arith.constant 0 : index
    %c0_15 = arith.constant 0 : index
    %39 = vector.load %arg6[%c0_13, %c0_14, %c0_15] : memref<1x16x128xf32, #tpu.memory_space<vmem>>, vector<1x16x128xf32>
    %40 = vector.shape_cast %39 : vector<1x16x128xf32> to vector<16x128xf32>
    %41 = vector.shape_cast %38 : vector<16x128xf32> to vector<1x16x128xf32>
    tpu.vector_store %arg6[%c0_13, %c0_14, %c0_15], %41 {strides = array<i32>} : memref<1x16x128xf32, #tpu.memory_space<vmem>>, vector<1x16x128xf32>,
    return
  }
  func.func @transform_0(%arg0: i32, %arg1: i32, %arg2: i32) -> (i32, i32) {
    %c2_i32 = arith.constant 2 : i32
    %0 = arith.muli %arg0, %c2_i32 : i32
    %1 = arith.addi %0, %arg2 : i32
    %c0_i32 = arith.constant 0 : i32
    %c0_i32_0 = arith.constant 0 : i32
    return %c0_i32, %1 : i32, i32
  }
  func.func @transform_1(%arg0: i32, %arg1: i32, %arg2: i32) -> (i32, i32) {
    %c0_i32 = arith.constant 0 : i32
    %c0_i32_0 = arith.constant 0 : i32
    return %c0_i32, %arg1 : i32, i32
  }
  func.func @transform_2(%arg0: i32, %arg1: i32, %arg2: i32) -> (i32, i32) {
    %c0_i32 = arith.constant 0 : i32
    %c0_i32_0 = arith.constant 0 : i32
    return %c0_i32, %arg1 : i32, i32
  }
  func.func @transform_3(%arg0: i32, %arg1: i32, %arg2: i32) -> (i32, i32, i32) {
    %c0_i32 = arith.constant 0 : i32
    %c0_i32_0 = arith.constant 0 : i32
    return %arg0, %c0_i32, %arg1 : i32, i32, i32
  }
}

</mosaic_0001>

<llo_original>
// kernel: tpu_custom_call.1
$region0: #{tpu_custom_call.1}
  #allocation0 [shape = 'u32[]', space=smem, size = 0x4, offset = 0x4, fixed_abs, tag = 'smem constant byte address 0x4 - core index']
  #allocation1 [shape = 'u32[144,128]{1,0:T(1,128)}', space=vmem, size = 0x12000, scoped, tag = 'internal scratch']
  %s0 = inlined_call_operand.hbm [shape: s32[2,1024], index: 0, kind: input, shape index: {}]
  %s1 = inlined_call_operand.hbm [shape: bf16[32,128], index: 1, kind: input, shape index: {}]
  %s2 = inlined_call_operand.hbm [shape: bf16[32,128], index: 2, kind: input, shape index: {}]
  %s3 = inlined_call_operand.hbm [shape: f32[2,16,128], index: 3, kind: output, shape index: {}]
  %s4 = sld [smem:[#allocation0]]
  $region61: #{tpu_custom_call.1} parent=0
    _
  %s6 = ssub.s32 1, %s4
  %s7 = scalar_select 0, %s6, %s4
  $region1: #{tpu_custom_call.1} parent=0
    #allocation2 [shape = 'u8[4096]{0}', space=vmem, size = 0x1000, scoped, tag = 'input window, operand 0']
    #allocation3 [shape = 's32[2]{0}', space=sflag, size = 0x8, scoped, tag = 'scoped memory for tpu_custom_call.1']
    #allocation4 [shape = 's32[2]{0}', space=sflag, size = 0x8, scoped, tag = 'scoped memory for tpu_custom_call.1']
    #allocation5 [shape = 'u8[8192]{0}', space=vmem, size = 0x2000, scoped, tag = 'input window, operand 1, single buffered']
    #allocation6 [shape = 's32[1]{0}', space=sflag, size = 0x4, scoped, tag = 'scoped memory for tpu_custom_call.1']
    #allocation7 [shape = 'u8[8192]{0}', space=vmem, size = 0x2000, scoped, tag = 'input window, operand 2, single buffered']
    #allocation8 [shape = 'u8[16384]{0}', space=vmem, size = 0x4000, scoped, tag = 'output window, operand 0']
    %8 = vsyncpa [#allocation3], 0
    %s9 = scalar_lea.sflag [#allocation3], 1
    %10 = vsyncpa %s9, 0
    %11 = vsyncpa [#allocation6], 0
    %12 = vsyncpa [#allocation4], 0
    %s13 = scalar_lea.sflag [#allocation4], 1
    %14 = vsyncpa %s13, 0
    loop: start=0, step=1, limit=6
    $region2: #{tpu_custom_call.1} parent=1 // loop_pre_header
      _
    $region3: #{tpu_custom_call.1} parent=1 // loop_header
      %s16 = sphi 0, %s20
      %p17 = scmp.ge.s32.totalorder %s16, 6
      %s23 = sphi 0, %s42
      %s24 = sphi 0, %s38
      %s25 = sphi 0, %s34
      %s26 = sphi 0, %s23
      %s27 = sphi 0, %s24
      %s28 = sphi 0, %s25
      %s29 = sphi 0, %s26
      %s30 = sphi 0, %s27
      %s31 = sphi 0, %s28
      %s49 = sphi 0, %s51
      %s52 = sphi 0, %s49
      %s53 = sphi 0, %s52
      %s69 = sphi 0, %s53
      %s75 = sphi 0, %s77
      %s78 = sphi 0, %s75
      %s79 = sphi 0, %s78
      %s95 = sphi 0, %s79
      %s101 = sphi 0, %s103
      %s104 = sphi 0, %s101
      %s105 = sphi 0, %s104
      %s121 = sphi 0, %s105
      %s129 = sphi 0, %s131
      %s132 = sphi 0, %s129
      %s133 = sphi 0, %s132
      %s149 = sphi 0, %s133
    $region4: #{tpu_custom_call.1} parent=1 // loop_header_branch
      %19 = sbr.rel (%p17) target = $region8
    $region5: #{tpu_custom_call.1} parent=1 // loop_body
      %s21 = ssub.s32 %s16, 1
      %s22 = ssub.s32 %s16, 2
      %s32 = sadd.s32 1, %s25
      %p33 = scmp.ge.s32.totalorder %s32, 2
      %s34 = scalar_select %p33, 0, %s32
      %s35 = sadd.s32 1, %s24
      %s36 = scalar_select %p33, %s35, %s24
      %p37 = scmp.ge.s32.totalorder %s36, 1
      %s38 = scalar_select %p37, 0, %s36
      %s39 = sadd.s32 1, %s23
      %s40 = scalar_select %p37, %s39, %s23
      %p41 = scmp.ge.s32.totalorder %s40, 2
      %s42 = scalar_select %p41, 0, %s40
      %s43 = smul.u32 %s23, 2
      %s44 = sadd.s32 %s43, %s25
      %s45 = smul.u32 %s42, 2
      %s46 = sadd.s32 %s45, %s34
      %s47 = ssub.s32 %s44, %s46
      %p48 = scmp.eq.s32.totalorder %s47, 0
      %s50 = sadd.s32 %s49, 1
      %s51 = scalar_select %p48, %s49, %s50
      %p54 = pneg %p48
      %p55 = scmp.eq.s32.totalorder %s16, 3
      %p56 = por %p54, %p55
      %p57 = scmp.ne.s32.totalorder %s49, %s52
      %p58 = scmp.eq.s32.totalorder %s16, 0
      %p59 = por %p57, %p58
      %p60 = scmp.ne.s32.totalorder %s49, %s52
      %p61 = scmp.eq.s32.totalorder %s21, 3
      %p62 = por %p60, %p61
      %p63 = scmp.ne.s32.totalorder %s52, %s53
      %p64 = scmp.eq.s32.totalorder %s21, 0
      %p65 = por %p63, %p64
      %p66 = scmp.ne.s32.totalorder %s52, %s53
      %p67 = scmp.eq.s32.totalorder %s22, 3
      %p68 = por %p66, %p67
      %p70 = scmp.ne.s32.totalorder %s53, %s69
      %p71 = scmp.eq.s32.totalorder %s22, 0
      %p72 = por %p70, %p71
      %s73 = ssub.s32 %s24, %s38
      %p74 = scmp.eq.s32.totalorder %s73, 0
      %s76 = sadd.s32 %s75, 1
      %s77 = scalar_select %p74, %s75, %s76
      %p80 = pneg %p74
      %p81 = scmp.eq.s32.totalorder %s16, 3
      %p82 = por %p80, %p81
      %p83 = scmp.ne.s32.totalorder %s75, %s78
      %p84 = scmp.eq.s32.totalorder %s16, 0
      %p85 = por %p83, %p84
      %p86 = scmp.ne.s32.totalorder %s75, %s78
      %p87 = scmp.eq.s32.totalorder %s21, 3
      %p88 = por %p86, %p87
      %p89 = scmp.ne.s32.totalorder %s78, %s79
      %p90 = scmp.eq.s32.totalorder %s21, 0
      %p91 = por %p89, %p90
      %p92 = scmp.ne.s32.totalorder %s78, %s79
      %p93 = scmp.eq.s32.totalorder %s22, 3
      %p94 = por %p92, %p93
      %p96 = scmp.ne.s32.totalorder %s79, %s95
      %p97 = scmp.eq.s32.totalorder %s22, 0
      %p98 = por %p96, %p97
      %s99 = ssub.s32 %s24, %s38
      %p100 = scmp.eq.s32.totalorder %s99, 0
      %s102 = sadd.s32 %s101, 1
      %s103 = scalar_select %p100, %s101, %s102
      %p106 = pneg %p100
      %p107 = scmp.eq.s32.totalorder %s16, 3
      %p108 = por %p106, %p107
      %p109 = scmp.ne.s32.totalorder %s101, %s104
      %p110 = scmp.eq.s32.totalorder %s16, 0
      %p111 = por %p109, %p110
      %p112 = scmp.ne.s32.totalorder %s101, %s104
      %p113 = scmp.eq.s32.totalorder %s21, 3
      %p114 = por %p112, %p113
      %p115 = scmp.ne.s32.totalorder %s104, %s105
      %p116 = scmp.eq.s32.totalorder %s21, 0
      %p117 = por %p115, %p116
      %p118 = scmp.ne.s32.totalorder %s104, %s105
      %p119 = scmp.eq.s32.totalorder %s22, 3
      %p120 = por %p118, %p119
      %p122 = scmp.ne.s32.totalorder %s105, %s121
      %p123 = scmp.eq.s32.totalorder %s22, 0
      %p124 = por %p122, %p123
      %s125 = ssub.s32 %s23, %s42
      %s126 = ssub.s32 %s24, %s38
      %s127 = sor.u32 %s125, %s126
      %p128 = scmp.eq.s32.totalorder %s127, 0
      %s130 = sadd.s32 %s129, 1
      %s131 = scalar_select %p128, %s129, %s130
      %p134 = pneg %p128
      %p135 = scmp.eq.s32.totalorder %s16, 3
      %p136 = por %p134, %p135
      %p137 = scmp.ne.s32.totalorder %s129, %s132
      %p138 = scmp.eq.s32.totalorder %s16, 0
      %p139 = por %p137, %p138
      %p140 = scmp.ne.s32.totalorder %s129, %s132
      %p141 = scmp.eq.s32.totalorder %s21, 3
      %p142 = por %p140, %p141
      %p143 = scmp.ne.s32.totalorder %s132, %s133
      %p144 = scmp.eq.s32.totalorder %s21, 0
      %p145 = por %p143, %p144
      %p146 = scmp.ne.s32.totalorder %s132, %s133
      %p147 = scmp.eq.s32.totalorder %s22, 3
      %p148 = por %p146, %p147
      %p150 = scmp.ne.s32.totalorder %s133, %s149
      %p151 = scmp.eq.s32.totalorder %s22, 0
      %p152 = por %p150, %p151
      %p153 = scmp.le.s32.totalorder 1, %s16
      %p154 = scmp.lt.s32.totalorder %s16, 5
      %p155 = pnand %p153, %p154
      %p156 = pneg %p155
      // Predicated region
      $region9: #{tpu_custom_call.1} parent=5 // pred_check
        _
      $region10: #{tpu_custom_call.1} parent=5 // pred_check_branch
        %158 = sbr.rel (%p155) target = $region12
      $region11: #{tpu_custom_call.1} parent=5 // pred_region
        %s159 = ssub.s32 %s16, 1
        // Predicated region
        $region13: #{tpu_custom_call.1} parent=11 // pred_check
          %p160 = pneg %p91
        $region14: #{tpu_custom_call.1} parent=11 // pred_check_branch
          %162 = sbr.rel (%p160) target = $region16
        $region15: #{tpu_custom_call.1} parent=11 // pred_region
          %s164 = ssub.s32 256, 256
          %165 = vsyncadd [#allocation6], %s164
          %s166 = smul.addr %s27, 64
          %s167 = scalar_lea.hbm %s1, %s166
          %s168 = sshll.u32 [#allocation5], 4
          %s169 = int_to_ptr.vmem [resolvable:$true] %s168
          %174 = dma.hbm_to_vmem [thread:$0]  %s167, 256, %s169, [#allocation6], 64, 64, 4
        $region16: #{tpu_custom_call.1} parent=11 // pred_fallthru
          _
        // Predicated region
        $region17: #{tpu_custom_call.1} parent=11 // pred_check
          %p175 = pneg %p117
        $region18: #{tpu_custom_call.1} parent=11 // pred_check_branch
          %177 = sbr.rel (%p175) target = $region20
        $region19: #{tpu_custom_call.1} parent=11 // pred_region
          %s179 = ssub.s32 256, 256
          %180 = vsyncadd [#allocation6], %s179
          %s181 = smul.addr %s27, 64
          %s182 = scalar_lea.hbm %s2, %s181
          %s183 = sshll.u32 [#allocation7], 4
          %s184 = int_to_ptr.vmem [resolvable:$true] %s183
          %189 = dma.hbm_to_vmem [thread:$0]  %s182, 256, %s184, [#allocation6], 64, 64, 4
        $region20: #{tpu_custom_call.1} parent=11 // pred_fallthru
          _
      $region12: #{tpu_custom_call.1} parent=5 // pred_fallthru
        _
      %p190 = scmp.lt.s32.totalorder %s16, 4
      // Predicated region
      $region21: #{tpu_custom_call.1} parent=5 // pred_check
        %p191 = pneg %p190
      $region22: #{tpu_custom_call.1} parent=5 // pred_check_branch
        %193 = sbr.rel (%p191) target = $region24
      $region23: #{tpu_custom_call.1} parent=5 // pred_region
        // Predicated region
        $region25: #{tpu_custom_call.1} parent=23 // pred_check
          %p194 = pneg %p59
        $region26: #{tpu_custom_call.1} parent=23 // pred_check_branch
          %196 = sbr.rel (%p194) target = $region28
        $region27: #{tpu_custom_call.1} parent=23 // pred_region
          %s197 = sand.u32 %s49, 1
          %s198 = scalar_lea.sflag [#allocation3], %s197
          %s199 = sand.u32 %s49, 1
          %s200 = smul.addr %s199, 4
          %s201 = scalar_lea.vmem [#allocation2], %s200
          %s202 = smul.u32 %s23, 2
          %s203 = sadd.s32 %s202, %s25
          %s204 = smul.u32 2, %s203
          %s206 = ssub.s32 64, 64
          %207 = vsyncadd %s198, %s206
          %s208 = smul.addr %s204, 32
          %s209 = scalar_lea.hbm %s0, %s208
          %s211 = sshll.u32 %s201, 4
          %s212 = int_to_ptr.vmem [resolvable:$true] %s211
          %214 = dma.hbm_to_vmem [thread:$0]  %s209, 64, %s212, %s198
        $region28: #{tpu_custom_call.1} parent=23 // pred_fallthru
          _
      $region24: #{tpu_custom_call.1} parent=5 // pred_fallthru
        _
      %p215 = scmp.le.s32.totalorder 1, %s16
      %p216 = scmp.lt.s32.totalorder %s16, 5
      %p217 = pnand %p215, %p216
      %p218 = pneg %p217
      // Predicated region
      $region29: #{tpu_custom_call.1} parent=5 // pred_check
        _
      $region30: #{tpu_custom_call.1} parent=5 // pred_check_branch
        %220 = sbr.rel (%p217) target = $region32
      $region31: #{tpu_custom_call.1} parent=5 // pred_region
        %s221 = ssub.s32 %s16, 1
        %s222 = sand.u32 %s52, 1
        %s223 = scalar_lea.sflag [#allocation3], %s222
        %s224 = sand.u32 %s52, 1
        %s225 = smul.addr %s224, 4
        %s226 = scalar_lea.vmem [#allocation2], %s225
        // Predicated region
        $region33: #{tpu_custom_call.1} parent=31 // pred_check
          %p227 = pneg %p65
        $region34: #{tpu_custom_call.1} parent=31 // pred_check_branch
          %229 = sbr.rel (%p227) target = $region36
        $region35: #{tpu_custom_call.1} parent=31 // pred_region
          %230 = dma.done %s223, 64
        $region36: #{tpu_custom_call.1} parent=31 // pred_fallthru
          _
        // Predicated region
        $region37: #{tpu_custom_call.1} parent=31 // pred_check
          %p231 = pneg %p91
        $region38: #{tpu_custom_call.1} parent=31 // pred_check_branch
          %233 = sbr.rel (%p231) target = $region40
        $region39: #{tpu_custom_call.1} parent=31 // pred_region
          %234 = dma.done [#allocation6], 256
        $region40: #{tpu_custom_call.1} parent=31 // pred_fallthru
          _
        // Predicated region
        $region41: #{tpu_custom_call.1} parent=31 // pred_check
          %p235 = pneg %p117
        $region42: #{tpu_custom_call.1} parent=31 // pred_check_branch
          %237 = sbr.rel (%p235) target = $region44
        $region43: #{tpu_custom_call.1} parent=31 // pred_region
          %238 = dma.done [#allocation6], 256
        $region44: #{tpu_custom_call.1} parent=31 // pred_fallthru
          _
        %s239 = sand.u32 %s52, 1
        %s240 = scalar_lea.sflag [#allocation3], %s239
        %s241 = sand.u32 %s52, 1
        %s242 = smul.addr %s241, 4
        %s243 = scalar_lea.vmem [#allocation2], %s242
        %p244 = pneg %p65
        %p245 = pneg %p62
        %p246 = pneg %p91
        %p247 = pneg %p88
        %p248 = pneg %p117
        %p249 = pneg %p114
        %p250 = pneg %p145
        %p251 = pneg %p142
        %s252 = sand.u32 %s132, 1
        %s253 = scalar_lea.sflag [#allocation4], %s252
        %s254 = sand.u32 %s132, 1
        %s255 = smul.addr %s254, 16
        %s256 = scalar_lea.vmem [#allocation8], %s255
        %s257 = smul.u32 %s26, 2
        %s258 = sadd.s32 %s257, %s28
        %s259 = smul.u32 2, %s258
        %p261 = scmp.eq.s32.totalorder %s28, 0
        // Predicated region
        $region45: #{tpu_custom_call.1} parent=31 // pred_check
          %p262 = pneg %p261
        $region46: #{tpu_custom_call.1} parent=31 // pred_check_branch
          %264 = sbr.rel (%p262) target = $region48
        $region47: #{tpu_custom_call.1} parent=31 // pred_region
          %265 = vst [vmem:[%s256] sm:$0xff] 0.0
          %266 = vst [vmem:[%s256 + $0x8] sm:$0xff] 0.0
        $region48: #{tpu_custom_call.1} parent=31 // pred_fallthru
          _
        %v267 = vld [vmem:[%s226] ss:$2 sm:$0x3]
        %s268 = scalar_lea.vmem %s226, 1 [#allocation2]
        %v269 = vld [vmem:[%s268] ss:$2 sm:$0x3]
        %v270 = vlaneseq
        %v271 = vshrl.u32 %v270, 7
        %v272 = vadd.s32 %v271, 8
        %v273 = vadd.s32 %v271, 16
        %v274 = vadd.s32 %v271, 24
        %v275 = vlaneseq
        %v276 = vshrl.u32 %v275, 7
        %v277 = vsub.s32 0, %v276
        %v278 = vrot.slane %v267, %v277
        %v279 = vlaneseq
        %v280 = vshrl.u32 %v279, 7
        %v281 = vsub.s32 1, %v280
        %v282 = vrot.slane %v267, %v281
        %vm283 = vcmp.eq.s32.totalorder %v271, %v278
        %vm284 = vcmp.eq.s32.totalorder %v271, %v282
        %vm285 = vcmp.eq.s32.totalorder %v272, %v278
        %vm286 = vcmp.eq.s32.totalorder %v272, %v282
        %vm287 = vcmp.eq.s32.totalorder %v273, %v278
        %vm288 = vcmp.eq.s32.totalorder %v273, %v282
        %vm289 = vcmp.eq.s32.totalorder %v274, %v278
        %vm290 = vcmp.eq.s32.totalorder %v274, %v282
        %v291 = vadd.s32 %v269, 16
        %v292 = vlaneseq
        %v293 = vshrl.u32 %v292, 7
        %v294 = vsub.s32 0, %v293
        %v295 = vrot.slane %v291, %v294
        %v296 = vlaneseq
        %v297 = vshrl.u32 %v296, 7
        %v298 = vsub.s32 1, %v297
        %v299 = vrot.slane %v291, %v298
        %vm300 = vcmp.eq.s32.totalorder %v271, %v295
        %vm301 = vcmp.eq.s32.totalorder %v271, %v299
        %vm302 = vcmp.eq.s32.totalorder %v272, %v295
        %vm303 = vcmp.eq.s32.totalorder %v272, %v299
        %vm304 = vcmp.eq.s32.totalorder %v273, %v295
        %vm305 = vcmp.eq.s32.totalorder %v273, %v299
        %vm306 = vcmp.eq.s32.totalorder %v274, %v295
        %vm307 = vcmp.eq.s32.totalorder %v274, %v299
        %vm308 = vmor %vm283, %vm300
        %vm309 = vmor %vm284, %vm301
        %vm310 = vmor %vm285, %vm302
        %vm311 = vmor %vm286, %vm303
        %vm312 = vmor %vm287, %vm304
        %vm313 = vmor %vm288, %vm305
        %vm314 = vmor %vm289, %vm306
        %vm315 = vmor %vm290, %vm307
        %v316 = vsel %vm308, 1, 0
        %v317 = vsel %vm309, 1, 0
        %v318 = vsel %vm310, 1, 0
        %v319 = vsel %vm311, 1, 0
        %v320 = vsel %vm312, 1, 0
        %v321 = vsel %vm313, 1, 0
        %v322 = vsel %vm314, 1, 0
        %v323 = vsel %vm315, 1, 0
        %v324 = vcvt.s32.f32 %v316
        %v325 = vcvt.s32.f32 %v317
        %v326 = vcvt.s32.f32 %v318
        %v327 = vcvt.s32.f32 %v319
        %v328 = vcvt.s32.f32 %v320
        %v329 = vcvt.s32.f32 %v321
        %v330 = vcvt.s32.f32 %v322
        %v331 = vcvt.s32.f32 %v323
        %v332 = vpack.c.bf16 %v326, %v324
        %v333 = vpack.c.bf16 %v327, %v325
        %v334 = vpack.c.bf16 %v330, %v328
        %v335 = vpack.c.bf16 %v331, %v329
        %v336 = vld [vmem:[#allocation5] sm:$0xf]
        %v337 = vld [vmem:[#allocation5 + $0x4] sm:$0xf]
        %v338 = vld [vmem:[#allocation5 + $0x8] sm:$0xf]
        %v339 = vld [vmem:[#allocation5 + $0xc] sm:$0xf]
        %340 = vxpose.xlu0.c.b16.start [1/8] %v332, 128
        %341 = vxpose.xlu0.c.b16.cont [2/8] %v334, 128
        %342 = vxpose.xlu0.c.b16.cont [3/8] 0, 128
        %343 = vxpose.xlu0.c.b16.cont [4/8] 0, 128
        %344 = vxpose.xlu0.c.b16.cont [5/8] 0, 128
        %345 = vxpose.xlu0.c.b16.cont [6/8] 0, 128
        %346 = vxpose.xlu0.c.b16.cont [7/8] 0, 128
        %347 = vxpose.xlu0.c.b16.end [8/8] 0, 128
        %v348 = vpop.trf.xlu0
        %v349 = vpop.trf.xlu0
        %v350 = vpop.trf.xlu0
        %v351 = vpop.trf.xlu0
        %v352 = vpop.trf.xlu0
        %v353 = vpop.trf.xlu0
        %v354 = vpop.trf.xlu0
        %v355 = vpop.trf.xlu0
        %356 = vxpose.xlu0.c.b16.start [1/8] %v333, 128
        %357 = vxpose.xlu0.c.b16.cont [2/8] %v335, 128
        %358 = vxpose.xlu0.c.b16.cont [3/8] 0, 128
        %359 = vxpose.xlu0.c.b16.cont [4/8] 0, 128
        %360 = vxpose.xlu0.c.b16.cont [5/8] 0, 128
        %361 = vxpose.xlu0.c.b16.cont [6/8] 0, 128
        %362 = vxpose.xlu0.c.b16.cont [7/8] 0, 128
        %363 = vxpose.xlu0.c.b16.end [8/8] 0, 128
        %v364 = vpop.trf.xlu0
        %v365 = vpop.trf.xlu0
        %v366 = vpop.trf.xlu0
        %v367 = vpop.trf.xlu0
        %v368 = vpop.trf.xlu0
        %v369 = vpop.trf.xlu0
        %v370 = vpop.trf.xlu0
        %v371 = vpop.trf.xlu0
        %v376 = vunpack.c.l.b16 %v336
        %v377 = vunpack.c.l.b16 %v337
        %v378 = vunpack.c.l.b16 %v338
        %v379 = vunpack.c.l.b16 %v339
        %v380 = vpack.c.b16 %v377, %v376
        %v381 = vpack.c.b16 %v379, %v378
        %vm384 = vcmask 261120
        %v386 = vsel %vm384, %v348, 0
        %v389 = vsel %vm384, %v349, 0
        %v392 = vsel %vm384, %v350, 0
        %v395 = vsel %vm384, %v351, 0
        %v398 = vsel %vm384, %v352, 0
        %v401 = vsel %vm384, %v353, 0
        %v404 = vsel %vm384, %v354, 0
        %v407 = vsel %vm384, %v355, 0
        %v410 = vsel %vm384, %v364, 0
        %v413 = vsel %vm384, %v365, 0
        %v416 = vsel %vm384, %v366, 0
        %v419 = vsel %vm384, %v367, 0
        %v422 = vsel %vm384, %v368, 0
        %v425 = vsel %vm384, %v369, 0
        %v428 = vsel %vm384, %v370, 0
        %v431 = vsel %vm384, %v371, 0
        %433 = vmatprep.subr.bf16.mxu0 0
        %434 = vmatpush1.bf16.msra.mxu0 %v380
        %435 = vmatprep.subr.bf16.mxu0 0
        %436 = vmatpush1.bf16.msra.mxu0 %v381
        %437 = vmatprep.subr.bf16.mxu0 0
        %438 = vmatpush1.bf16.msra.mxu0 0
        %439 = vmatprep.subr.bf16.mxu0 0
        %440 = vmatpush1.bf16.msra.mxu0 0
        %441 = vmatprep.subr.bf16.mxu0 0
        %442 = vmatpush1.bf16.msra.mxu0 0
        %443 = vmatprep.subr.bf16.mxu0 0
        %444 = vmatpush1.bf16.msra.mxu0 0
        %445 = vmatprep.subr.bf16.mxu0 0
        %446 = vmatpush1.bf16.msra.mxu0 0
        %447 = vmatprep.subr.bf16.mxu0 0
        %448 = vmatpush1.bf16.msra.mxu0 0
        %449 = vmatprep.subr.bf16.mxu0 0
        %450 = vmatpush1.bf16.msra.mxu0 0
        %451 = vmatprep.subr.bf16.mxu0 0
        %452 = vmatpush1.bf16.msra.mxu0 0
        %453 = vmatprep.subr.bf16.mxu0 0
        %454 = vmatpush1.bf16.msra.mxu0 0
        %455 = vmatprep.subr.bf16.mxu0 0
        %456 = vmatpush1.bf16.msra.mxu0 0
        %457 = vmatprep.subr.bf16.mxu0 0
        %458 = vmatpush1.bf16.msra.mxu0 0
        %459 = vmatprep.subr.bf16.mxu0 0
        %460 = vmatpush1.bf16.msra.mxu0 0
        %461 = vmatprep.subr.bf16.mxu0 0
        %462 = vmatpush1.bf16.msra.mxu0 0
        %463 = vmatprep.subr.bf16.mxu0 0
        %464 = vmatpush1.bf16.msra.mxu0 0
        %465 = vmatprep.mubr.bf16.mxu0 0
        %466 = vmatmul.mubr.bf16.gmra.mrb[0].mxu0 %v386
        %v467 = vpop.f32.mrb[0].mxu0
        %v468 = vadd.f32 0.0, %v467
        %v469 = vpop.f32.mrb[0].mxu0
        %v470 = vpop.f32.mrb[0].mxu0
        %v471 = vadd.f32 0.0, %v470
        %v472 = vpop.f32.mrb[0].mxu0
        %473 = vmatprep.mubr.bf16.mxu0 0
        %474 = vmatmul.mubr.bf16.gmra.mrb[0].mxu0 %v389
        %v475 = vpop.f32.mrb[0].mxu0
        %v476 = vadd.f32 0.0, %v475
        %v477 = vpop.f32.mrb[0].mxu0
        %v478 = vpop.f32.mrb[0].mxu0
        %v479 = vadd.f32 0.0, %v478
        %v480 = vpop.f32.mrb[0].mxu0
        %481 = vmatprep.mubr.bf16.mxu0 0
        %482 = vmatmul.mubr.bf16.gmra.mrb[0].mxu0 %v392
        %v483 = vpop.f32.mrb[0].mxu0
        %v484 = vadd.f32 0.0, %v483
        %v485 = vpop.f32.mrb[0].mxu0
        %v486 = vpop.f32.mrb[0].mxu0
        %v487 = vadd.f32 0.0, %v486
        %v488 = vpop.f32.mrb[0].mxu0
        %489 = vmatprep.mubr.bf16.mxu0 0
        %490 = vmatmul.mubr.bf16.gmra.mrb[0].mxu0 %v395
        %v491 = vpop.f32.mrb[0].mxu0
        %v492 = vadd.f32 0.0, %v491
        %v493 = vpop.f32.mrb[0].mxu0
        %v494 = vpop.f32.mrb[0].mxu0
        %v495 = vadd.f32 0.0, %v494
        %v496 = vpop.f32.mrb[0].mxu0
        %497 = vmatprep.mubr.bf16.mxu0 0
        %498 = vmatmul.mubr.bf16.gmra.mrb[0].mxu0 %v398
        %v499 = vpop.f32.mrb[0].mxu0
        %v500 = vadd.f32 0.0, %v499
        %v501 = vpop.f32.mrb[0].mxu0
        %v502 = vpop.f32.mrb[0].mxu0
        %v503 = vadd.f32 0.0, %v502
        %v504 = vpop.f32.mrb[0].mxu0
        %505 = vmatprep.mubr.bf16.mxu0 0
        %506 = vmatmul.mubr.bf16.gmra.mrb[0].mxu0 %v401
        %v507 = vpop.f32.mrb[0].mxu0
        %v508 = vadd.f32 0.0, %v507
        %v509 = vpop.f32.mrb[0].mxu0
        %v510 = vpop.f32.mrb[0].mxu0
        %v511 = vadd.f32 0.0, %v510
        %v512 = vpop.f32.mrb[0].mxu0
        %513 = vmatprep.mubr.bf16.mxu0 0
        %514 = vmatmul.mubr.bf16.gmra.mrb[0].mxu0 %v404
        %v515 = vpop.f32.mrb[0].mxu0
        %v516 = vadd.f32 0.0, %v515
        %v517 = vpop.f32.mrb[0].mxu0
        %v518 = vpop.f32.mrb[0].mxu0
        %v519 = vadd.f32 0.0, %v518
        %v520 = vpop.f32.mrb[0].mxu0
        %521 = vmatprep.mubr.bf16.mxu0 0
        %522 = vmatmul.mubr.bf16.gmra.mrb[0].mxu0 %v407
        %v523 = vpop.f32.mrb[0].mxu0
        %v524 = vadd.f32 0.0, %v523
        %v525 = vpop.f32.mrb[0].mxu0
        %v526 = vpop.f32.mrb[0].mxu0
        %v527 = vadd.f32 0.0, %v526
        %v528 = vpop.f32.mrb[0].mxu0
        %529 = vmatprep.mubr.bf16.mxu0 0
        %530 = vmatmul.mubr.bf16.gmra.mrb[0].mxu0 %v410
        %v531 = vpop.f32.mrb[0].mxu0
        %v532 = vadd.f32 0.0, %v531
        %v533 = vpop.f32.mrb[0].mxu0
        %v534 = vpop.f32.mrb[0].mxu0
        %v535 = vadd.f32 0.0, %v534
        %v536 = vpop.f32.mrb[0].mxu0
        %537 = vmatprep.mubr.bf16.mxu0 0
        %538 = vmatmul.mubr.bf16.gmra.mrb[0].mxu0 %v413
        %v539 = vpop.f32.mrb[0].mxu0
        %v540 = vadd.f32 0.0, %v539
        %v541 = vpop.f32.mrb[0].mxu0
        %v542 = vpop.f32.mrb[0].mxu0
        %v543 = vadd.f32 0.0, %v542
        %v544 = vpop.f32.mrb[0].mxu0
        %545 = vmatprep.mubr.bf16.mxu0 0
        %546 = vmatmul.mubr.bf16.gmra.mrb[0].mxu0 %v416
        %v547 = vpop.f32.mrb[0].mxu0
        %v548 = vadd.f32 0.0, %v547
        %v549 = vpop.f32.mrb[0].mxu0
        %v550 = vpop.f32.mrb[0].mxu0
        %v551 = vadd.f32 0.0, %v550
        %v552 = vpop.f32.mrb[0].mxu0
        %553 = vmatprep.mubr.bf16.mxu0 0
        %554 = vmatmul.mubr.bf16.gmra.mrb[0].mxu0 %v419
        %v555 = vpop.f32.mrb[0].mxu0
        %v556 = vadd.f32 0.0, %v555
        %v557 = vpop.f32.mrb[0].mxu0
        %v558 = vpop.f32.mrb[0].mxu0
        %v559 = vadd.f32 0.0, %v558
        %v560 = vpop.f32.mrb[0].mxu0
        %561 = vmatprep.mubr.bf16.mxu0 0
        %562 = vmatmul.mubr.bf16.gmra.mrb[0].mxu0 %v422
        %v563 = vpop.f32.mrb[0].mxu0
        %v564 = vadd.f32 0.0, %v563
        %v565 = vpop.f32.mrb[0].mxu0
        %v566 = vpop.f32.mrb[0].mxu0
        %v567 = vadd.f32 0.0, %v566
        %v568 = vpop.f32.mrb[0].mxu0
        %569 = vmatprep.mubr.bf16.mxu0 0
        %570 = vmatmul.mubr.bf16.gmra.mrb[0].mxu0 %v425
        %v571 = vpop.f32.mrb[0].mxu0
        %v572 = vadd.f32 0.0, %v571
        %v573 = vpop.f32.mrb[0].mxu0
        %v574 = vpop.f32.mrb[0].mxu0
        %v575 = vadd.f32 0.0, %v574
        %v576 = vpop.f32.mrb[0].mxu0
        %577 = vmatprep.mubr.bf16.mxu0 0
        %578 = vmatmul.mubr.bf16.gmra.mrb[0].mxu0 %v428
        %v579 = vpop.f32.mrb[0].mxu0
        %v580 = vadd.f32 0.0, %v579
        %v581 = vpop.f32.mrb[0].mxu0
        %v582 = vpop.f32.mrb[0].mxu0
        %v583 = vadd.f32 0.0, %v582
        %v584 = vpop.f32.mrb[0].mxu0
        %585 = vmatprep.mubr.bf16.mxu0 0
        %586 = vmatmul.mubr.bf16.gmra.mrb[0].mxu0 %v431
        %v587 = vpop.f32.mrb[0].mxu0
        %v588 = vadd.f32 0.0, %v587
        %v589 = vpop.f32.mrb[0].mxu0
        %v590 = vpop.f32.mrb[0].mxu0
        %v591 = vadd.f32 0.0, %v590
        %v592 = vpop.f32.mrb[0].mxu0
        %593 = vdwg.mxu0
        %v594 = vld [vmem:[#allocation7] sm:$0xf]
        %v595 = vld [vmem:[#allocation7 + $0x4] sm:$0xf]
        %v596 = vld [vmem:[#allocation7 + $0x8] sm:$0xf]
        %v597 = vld [vmem:[#allocation7 + $0xc] sm:$0xf]
        %v602 = vunpack.c.l.b16 %v594
        %v603 = vunpack.c.l.b16 %v595
        %v604 = vunpack.c.l.b16 %v596
        %v605 = vunpack.c.l.b16 %v597
        %v606 = vpack.c.b16 %v603, %v602
        %v607 = vpack.c.b16 %v605, %v604
        %610 = vmatprep.subr.bf16.mxu0 0
        %611 = vmatpush1.bf16.msra.mxu0 %v606
        %612 = vmatprep.subr.bf16.mxu0 0
        %613 = vmatpush1.bf16.msra.mxu0 %v607
        %614 = vmatprep.subr.bf16.mxu0 0
        %615 = vmatpush1.bf16.msra.mxu0 0
        %616 = vmatprep.subr.bf16.mxu0 0
        %617 = vmatpush1.bf16.msra.mxu0 0
        %618 = vmatprep.subr.bf16.mxu0 0
        %619 = vmatpush1.bf16.msra.mxu0 0
        %620 = vmatprep.subr.bf16.mxu0 0
        %621 = vmatpush1.bf16.msra.mxu0 0
        %622 = vmatprep.subr.bf16.mxu0 0
        %623 = vmatpush1.bf16.msra.mxu0 0
        %624 = vmatprep.subr.bf16.mxu0 0
        %625 = vmatpush1.bf16.msra.mxu0 0
        %626 = vmatprep.subr.bf16.mxu0 0
        %627 = vmatpush1.bf16.msra.mxu0 0
        %628 = vmatprep.subr.bf16.mxu0 0
        %629 = vmatpush1.bf16.msra.mxu0 0
        %630 = vmatprep.subr.bf16.mxu0 0
        %631 = vmatpush1.bf16.msra.mxu0 0
        %632 = vmatprep.subr.bf16.mxu0 0
        %633 = vmatpush1.bf16.msra.mxu0 0
        %634 = vmatprep.subr.bf16.mxu0 0
        %635 = vmatpush1.bf16.msra.mxu0 0
        %636 = vmatprep.subr.bf16.mxu0 0
        %637 = vmatpush1.bf16.msra.mxu0 0
        %638 = vmatprep.subr.bf16.mxu0 0
        %639 = vmatpush1.bf16.msra.mxu0 0
        %640 = vmatprep.subr.bf16.mxu0 0
        %641 = vmatpush1.bf16.msra.mxu0 0
        %642 = vmatprep.mubr.bf16.mxu0 0
        %643 = vmatmul.mubr.bf16.gmra.mrb[0].mxu0 %v386
        %v644 = vpop.f32.mrb[0].mxu0
        %v645 = vadd.f32 0.0, %v644
        %v646 = vpop.f32.mrb[0].mxu0
        %v647 = vpop.f32.mrb[0].mxu0
        %v648 = vadd.f32 0.0, %v647
        %v649 = vpop.f32.mrb[0].mxu0
        %650 = vmatprep.mubr.bf16.mxu0 0
        %651 = vmatmul.mubr.bf16.gmra.mrb[0].mxu0 %v389
        %v652 = vpop.f32.mrb[0].mxu0
        %v653 = vadd.f32 0.0, %v652
        %v654 = vpop.f32.mrb[0].mxu0
        %v655 = vpop.f32.mrb[0].mxu0
        %v656 = vadd.f32 0.0, %v655
        %v657 = vpop.f32.mrb[0].mxu0
        %658 = vmatprep.mubr.bf16.mxu0 0
        %659 = vmatmul.mubr.bf16.gmra.mrb[0].mxu0 %v392
        %v660 = vpop.f32.mrb[0].mxu0
        %v661 = vadd.f32 0.0, %v660
        %v662 = vpop.f32.mrb[0].mxu0
        %v663 = vpop.f32.mrb[0].mxu0
        %v664 = vadd.f32 0.0, %v663
        %v665 = vpop.f32.mrb[0].mxu0
        %666 = vmatprep.mubr.bf16.mxu0 0
        %667 = vmatmul.mubr.bf16.gmra.mrb[0].mxu0 %v395
        %v668 = vpop.f32.mrb[0].mxu0
        %v669 = vadd.f32 0.0, %v668
        %v670 = vpop.f32.mrb[0].mxu0
        %v671 = vpop.f32.mrb[0].mxu0
        %v672 = vadd.f32 0.0, %v671
        %v673 = vpop.f32.mrb[0].mxu0
        %674 = vmatprep.mubr.bf16.mxu0 0
        %675 = vmatmul.mubr.bf16.gmra.mrb[0].mxu0 %v398
        %v676 = vpop.f32.mrb[0].mxu0
        %v677 = vadd.f32 0.0, %v676
        %v678 = vpop.f32.mrb[0].mxu0
        %v679 = vpop.f32.mrb[0].mxu0
        %v680 = vadd.f32 0.0, %v679
        %v681 = vpop.f32.mrb[0].mxu0
        %682 = vmatprep.mubr.bf16.mxu0 0
        %683 = vmatmul.mubr.bf16.gmra.mrb[0].mxu0 %v401
        %v684 = vpop.f32.mrb[0].mxu0
        %v685 = vadd.f32 0.0, %v684
        %v686 = vpop.f32.mrb[0].mxu0
        %v687 = vpop.f32.mrb[0].mxu0
        %v688 = vadd.f32 0.0, %v687
        %v689 = vpop.f32.mrb[0].mxu0
        %690 = vmatprep.mubr.bf16.mxu0 0
        %691 = vmatmul.mubr.bf16.gmra.mrb[0].mxu0 %v404
        %v692 = vpop.f32.mrb[0].mxu0
        %v693 = vadd.f32 0.0, %v692
        %v694 = vpop.f32.mrb[0].mxu0
        %v695 = vpop.f32.mrb[0].mxu0
        %v696 = vadd.f32 0.0, %v695
        %v697 = vpop.f32.mrb[0].mxu0
        %698 = vmatprep.mubr.bf16.mxu0 0
        %699 = vmatmul.mubr.bf16.gmra.mrb[0].mxu0 %v407
        %v700 = vpop.f32.mrb[0].mxu0
        %v701 = vadd.f32 0.0, %v700
        %v702 = vpop.f32.mrb[0].mxu0
        %v703 = vpop.f32.mrb[0].mxu0
        %v704 = vadd.f32 0.0, %v703
        %v705 = vpop.f32.mrb[0].mxu0
        %706 = vmatprep.mubr.bf16.mxu0 0
        %707 = vmatmul.mubr.bf16.gmra.mrb[0].mxu0 %v410
        %v708 = vpop.f32.mrb[0].mxu0
        %v709 = vadd.f32 0.0, %v708
        %v710 = vpop.f32.mrb[0].mxu0
        %v711 = vpop.f32.mrb[0].mxu0
        %v712 = vadd.f32 0.0, %v711
        %v713 = vpop.f32.mrb[0].mxu0
        %714 = vmatprep.mubr.bf16.mxu0 0
        %715 = vmatmul.mubr.bf16.gmra.mrb[0].mxu0 %v413
        %v716 = vpop.f32.mrb[0].mxu0
        %v717 = vadd.f32 0.0, %v716
        %v718 = vpop.f32.mrb[0].mxu0
        %v719 = vpop.f32.mrb[0].mxu0
        %v720 = vadd.f32 0.0, %v719
        %v721 = vpop.f32.mrb[0].mxu0
        %722 = vmatprep.mubr.bf16.mxu0 0
        %723 = vmatmul.mubr.bf16.gmra.mrb[0].mxu0 %v416
        %v724 = vpop.f32.mrb[0].mxu0
        %v725 = vadd.f32 0.0, %v724
        %v726 = vpop.f32.mrb[0].mxu0
        %v727 = vpop.f32.mrb[0].mxu0
        %v728 = vadd.f32 0.0, %v727
        %v729 = vpop.f32.mrb[0].mxu0
        %730 = vmatprep.mubr.bf16.mxu0 0
        %731 = vmatmul.mubr.bf16.gmra.mrb[0].mxu0 %v419
        %v732 = vpop.f32.mrb[0].mxu0
        %v733 = vadd.f32 0.0, %v732
        %v734 = vpop.f32.mrb[0].mxu0
        %v735 = vpop.f32.mrb[0].mxu0
        %v736 = vadd.f32 0.0, %v735
        %v737 = vpop.f32.mrb[0].mxu0
        %738 = vmatprep.mubr.bf16.mxu0 0
        %739 = vmatmul.mubr.bf16.gmra.mrb[0].mxu0 %v422
        %v740 = vpop.f32.mrb[0].mxu0
        %v741 = vadd.f32 0.0, %v740
        %v742 = vpop.f32.mrb[0].mxu0
        %v743 = vpop.f32.mrb[0].mxu0
        %v744 = vadd.f32 0.0, %v743
        %v745 = vpop.f32.mrb[0].mxu0
        %746 = vmatprep.mubr.bf16.mxu0 0
        %747 = vmatmul.mubr.bf16.gmra.mrb[0].mxu0 %v425
        %v748 = vpop.f32.mrb[0].mxu0
        %v749 = vadd.f32 0.0, %v748
        %v750 = vpop.f32.mrb[0].mxu0
        %v751 = vpop.f32.mrb[0].mxu0
        %v752 = vadd.f32 0.0, %v751
        %v753 = vpop.f32.mrb[0].mxu0
        %754 = vmatprep.mubr.bf16.mxu0 0
        %755 = vmatmul.mubr.bf16.gmra.mrb[0].mxu0 %v428
        %v756 = vpop.f32.mrb[0].mxu0
        %v757 = vadd.f32 0.0, %v756
        %v758 = vpop.f32.mrb[0].mxu0
        %v759 = vpop.f32.mrb[0].mxu0
        %v760 = vadd.f32 0.0, %v759
        %v761 = vpop.f32.mrb[0].mxu0
        %762 = vmatprep.mubr.bf16.mxu0 0
        %763 = vmatmul.mubr.bf16.gmra.mrb[0].mxu0 %v431
        %v764 = vpop.f32.mrb[0].mxu0
        %v765 = vadd.f32 0.0, %v764
        %v766 = vpop.f32.mrb[0].mxu0
        %v767 = vpop.f32.mrb[0].mxu0
        %v768 = vadd.f32 0.0, %v767
        %v769 = vpop.f32.mrb[0].mxu0
        %770 = vdwg.mxu0
        %v771 = vsel %vm283, 1, 0
        %v772 = vsel %vm284, 1, 0
        %v773 = vsel %vm285, 1, 0
        %v774 = vsel %vm286, 1, 0
        %v775 = vcvt.s32.f32 %v771
        %v776 = vcvt.s32.f32 %v772
        %v777 = vcvt.s32.f32 %v773
        %v778 = vcvt.s32.f32 %v774
        %v779 = vpack.c.bf16 %v777, %v775
        %v780 = vpack.c.bf16 %v778, %v776
        %v781 = vlaneseq
        %v782 = vshrl.u32 %v781, 7
        %v783 = vsub.s32 0, %v782
        %v784 = vrot.slane %v269, %v783
        %v785 = vlaneseq
        %v786 = vshrl.u32 %v785, 7
        %v787 = vsub.s32 1, %v786
        %v788 = vrot.slane %v269, %v787
        %vm789 = vcmp.eq.s32.totalorder %v271, %v784
        %vm790 = vcmp.eq.s32.totalorder %v271, %v788
        %vm791 = vcmp.eq.s32.totalorder %v272, %v784
        %vm792 = vcmp.eq.s32.totalorder %v272, %v788
        %v793 = vsel %vm789, 1, 0
        %v794 = vsel %vm790, 1, 0
        %v795 = vsel %vm791, 1, 0
        %v796 = vsel %vm792, 1, 0
        %v797 = vcvt.s32.f32 %v793
        %v798 = vcvt.s32.f32 %v794
        %v799 = vcvt.s32.f32 %v795
        %v800 = vcvt.s32.f32 %v796
        %v801 = vpack.c.bf16 %v799, %v797
        %v802 = vpack.c.bf16 %v800, %v798
        %v803 = vld [vmem:[%s256] sm:$0xff]
        %v804 = vld [vmem:[%s256 + $0x8] sm:$0xff]
        %v805 = vpack.c.bf16 %v471, %v468
        %v806 = vpack.c.bf16 %v479, %v476
        %v807 = vpack.c.bf16 %v487, %v484
        %v808 = vpack.c.bf16 %v495, %v492
        %v809 = vpack.c.bf16 %v503, %v500
        %v810 = vpack.c.bf16 %v511, %v508
        %v811 = vpack.c.bf16 %v519, %v516
        %v812 = vpack.c.bf16 %v527, %v524
        %v813 = vpack.c.bf16 %v535, %v532
        %v814 = vpack.c.bf16 %v543, %v540
        %v815 = vpack.c.bf16 %v551, %v548
        %v816 = vpack.c.bf16 %v559, %v556
        %v817 = vpack.c.bf16 %v567, %v564
        %v818 = vpack.c.bf16 %v575, %v572
        %v819 = vpack.c.bf16 %v583, %v580
        %v820 = vpack.c.bf16 %v591, %v588
        %v821 = vpack.c.bf16 %v648, %v645
        %v822 = vpack.c.bf16 %v656, %v653
        %v823 = vpack.c.bf16 %v664, %v661
        %v824 = vpack.c.bf16 %v672, %v669
        %v825 = vpack.c.bf16 %v680, %v677
        %v826 = vpack.c.bf16 %v688, %v685
        %v827 = vpack.c.bf16 %v696, %v693
        %v828 = vpack.c.bf16 %v704, %v701
        %v829 = vpack.c.bf16 %v712, %v709
        %v830 = vpack.c.bf16 %v720, %v717
        %v831 = vpack.c.bf16 %v728, %v725
        %v832 = vpack.c.bf16 %v736, %v733
        %v833 = vpack.c.bf16 %v744, %v741
        %v834 = vpack.c.bf16 %v752, %v749
        %v835 = vpack.c.bf16 %v760, %v757
        %v836 = vpack.c.bf16 %v768, %v765
        %837 = vmatprep.subr.bf16.mxu0 0
        %838 = vmatpush1.bf16.msra.mxu0 %v821
        %839 = vmatprep.subr.bf16.mxu0 0
        %840 = vmatpush1.bf16.msra.mxu0 %v822
        %841 = vmatprep.subr.bf16.mxu0 0
        %842 = vmatpush1.bf16.msra.mxu0 %v823
        %843 = vmatprep.subr.bf16.mxu0 0
        %844 = vmatpush1.bf16.msra.mxu0 %v824
        %845 = vmatprep.subr.bf16.mxu0 0
        %846 = vmatpush1.bf16.msra.mxu0 %v825
        %847 = vmatprep.subr.bf16.mxu0 0
        %848 = vmatpush1.bf16.msra.mxu0 %v826
        %849 = vmatprep.subr.bf16.mxu0 0
        %850 = vmatpush1.bf16.msra.mxu0 %v827
        %851 = vmatprep.subr.bf16.mxu0 0
        %852 = vmatpush1.bf16.msra.mxu0 %v828
        %853 = vmatprep.subr.bf16.mxu0 0
        %854 = vmatpush1.bf16.msra.mxu0 %v829
        %855 = vmatprep.subr.bf16.mxu0 0
        %856 = vmatpush1.bf16.msra.mxu0 %v830
        %857 = vmatprep.subr.bf16.mxu0 0
        %858 = vmatpush1.bf16.msra.mxu0 %v831
        %859 = vmatprep.subr.bf16.mxu0 0
        %860 = vmatpush1.bf16.msra.mxu0 %v832
        %861 = vmatprep.subr.bf16.mxu0 0
        %862 = vmatpush1.bf16.msra.mxu0 %v833
        %863 = vmatprep.subr.bf16.mxu0 0
        %864 = vmatpush1.bf16.msra.mxu0 %v834
        %865 = vmatprep.subr.bf16.mxu0 0
        %866 = vmatpush1.bf16.msra.mxu0 %v835
        %867 = vmatprep.subr.bf16.mxu0 0
        %868 = vmatpush1.bf16.msra.mxu0 %v836
        %869 = vmatprep.mubr.bf16.mxu0 %v802
        %870 = vmatmul.mubr.bf16.gmra.mrb[0].mxu0 %v801
        %v871 = vpop.f32.mrb[0].mxu0
        %v872 = vadd.f32 0.0, %v871
        %v873 = vpop.f32.mrb[0].mxu0
        %v874 = vpop.f32.mrb[0].mxu0
        %v875 = vadd.f32 0.0, %v874
        %v876 = vpop.f32.mrb[0].mxu0
        %877 = vdwg.mxu0
        %878 = vmatprep.subr.bf16.mxu0 0
        %879 = vmatpush1.bf16.msra.mxu0 %v805
        %880 = vmatprep.subr.bf16.mxu0 0
        %881 = vmatpush1.bf16.msra.mxu0 %v806
        %882 = vmatprep.subr.bf16.mxu0 0
        %883 = vmatpush1.bf16.msra.mxu0 %v807
        %884 = vmatprep.subr.bf16.mxu0 0
        %885 = vmatpush1.bf16.msra.mxu0 %v808
        %886 = vmatprep.subr.bf16.mxu0 0
        %887 = vmatpush1.bf16.msra.mxu0 %v809
        %888 = vmatprep.subr.bf16.mxu0 0
        %889 = vmatpush1.bf16.msra.mxu0 %v810
        %890 = vmatprep.subr.bf16.mxu0 0
        %891 = vmatpush1.bf16.msra.mxu0 %v811
        %892 = vmatprep.subr.bf16.mxu0 0
        %893 = vmatpush1.bf16.msra.mxu0 %v812
        %894 = vmatprep.subr.bf16.mxu0 0
        %895 = vmatpush1.bf16.msra.mxu0 %v813
        %896 = vmatprep.subr.bf16.mxu0 0
        %897 = vmatpush1.bf16.msra.mxu0 %v814
        %898 = vmatprep.subr.bf16.mxu0 0
        %899 = vmatpush1.bf16.msra.mxu0 %v815
        %900 = vmatprep.subr.bf16.mxu0 0
        %901 = vmatpush1.bf16.msra.mxu0 %v816
        %902 = vmatprep.subr.bf16.mxu0 0
        %903 = vmatpush1.bf16.msra.mxu0 %v817
        %904 = vmatprep.subr.bf16.mxu0 0
        %905 = vmatpush1.bf16.msra.mxu0 %v818
        %906 = vmatprep.subr.bf16.mxu0 0
        %907 = vmatpush1.bf16.msra.mxu0 %v819
        %908 = vmatprep.subr.bf16.mxu0 0
        %909 = vmatpush1.bf16.msra.mxu0 %v820
        %910 = vmatprep.mubr.bf16.mxu0 %v780
        %911 = vmatmul.mubr.bf16.gmra.mrb[0].mxu0 %v779
        %v912 = vpop.f32.mrb[0].mxu0
        %v913 = vadd.f32 %v872, %v912
        %v914 = vpop.f32.mrb[0].mxu0
        %v915 = vpop.f32.mrb[0].mxu0
        %v916 = vadd.f32 %v875, %v915
        %v917 = vpop.f32.mrb[0].mxu0
        %918 = vdwg.mxu0
        %v919 = vadd.f32 %v803, %v913
        %v920 = vadd.f32 %v804, %v916
        %921 = vst [vmem:[%s256] sm:$0xff] %v919
        %922 = vst [vmem:[%s256 + $0x8] sm:$0xff] %v920
        %s923 = sand.u32 %s132, 1
        %s924 = scalar_lea.sflag [#allocation4], %s923
        %s925 = sand.u32 %s132, 1
        %s926 = smul.addr %s925, 16
        %s927 = scalar_lea.vmem [#allocation8], %s926
        // Predicated region
        $region49: #{tpu_custom_call.1} parent=31 // pred_check
          %p928 = pneg %p142
        $region50: #{tpu_custom_call.1} parent=31 // pred_check_branch
          %930 = sbr.rel (%p928) target = $region52
        $region51: #{tpu_custom_call.1} parent=31 // pred_region
          %s932 = ssub.s32 256, 256
          %933 = vsyncadd %s924, %s932
          %s934 = smul.addr %s26, 2
          %s935 = sadd.s32 %s27, %s934
          %s936 = smul.addr %s935, 128
          %s937 = scalar_lea.hbm %s3, %s936
          %s938 = sshll.u32 %s927, 4
          %s939 = int_to_ptr.vmem [resolvable:$true] %s938
          %944 = dma.vmem_to_hbm [thread:$0]  %s939, 256, %s937, %s924, 128, 128, 8
        $region52: #{tpu_custom_call.1} parent=31 // pred_fallthru
          _
      $region32: #{tpu_custom_call.1} parent=5 // pred_fallthru
        _
      %p945 = scmp.le.s32.totalorder 2, %s16
      // Predicated region
      $region53: #{tpu_custom_call.1} parent=5 // pred_check
        %p946 = pneg %p945
      $region54: #{tpu_custom_call.1} parent=5 // pred_check_branch
        %948 = sbr.rel (%p946) target = $region56
      $region55: #{tpu_custom_call.1} parent=5 // pred_region
        %s949 = ssub.s32 %s16, 2
        // Predicated region
        $region57: #{tpu_custom_call.1} parent=55 // pred_check
          %p950 = pneg %p148
        $region58: #{tpu_custom_call.1} parent=55 // pred_check_branch
          %952 = sbr.rel (%p950) target = $region60
        $region59: #{tpu_custom_call.1} parent=55 // pred_region
          %s953 = sand.u32 %s133, 1
          %s954 = scalar_lea.sflag [#allocation4], %s953
          %s955 = sand.u32 %s133, 1
          %s956 = smul.addr %s955, 16
          %s957 = scalar_lea.vmem [#allocation8], %s956
          %958 = dma.done %s954, 256
        $region60: #{tpu_custom_call.1} parent=55 // pred_fallthru
          _
      $region56: #{tpu_custom_call.1} parent=5 // pred_fallthru
        _
    $region6: #{tpu_custom_call.1} parent=1 // loop_footer
      %s20 = sadd.s32 1, %s16
    $region7: #{tpu_custom_call.1} parent=1 // loop_footer_branch
      %15 = sbr.rel target = $region3
    $region8: #{tpu_custom_call.1} parent=1 // loop_exit
      _
    %959 = vsyncpa [#allocation3], 1
    %s960 = scalar_lea.sflag [#allocation3], 1
    %961 = vsyncpa %s960, 1
    %962 = vsyncpa [#allocation6], 1
    %963 = vsyncpa [#allocation4], 1
    %s964 = scalar_lea.sflag [#allocation4], 1
    %965 = vsyncpa %s964, 1

</llo_original>
